<compile_context>
chip_gen: v6e
topology: v6e:2x2x1
jax: 0.10.0
libtpu: 0.0.40
codegen_flags: <defaults>
</compile_context>

<pallas_src>
import functools

import jax
import jax.numpy as jnp
import numpy as np
from jax.experimental import pallas as pl
from jax.experimental.pallas import tpu as pltpu


# -----------------------------------------------------------------------------
# helpers
# -----------------------------------------------------------------------------
def _round_up(x, m):
    return (x + m - 1) // m * m


def _tpu_budget():
    """(multi_tensorcore_chip, vmem_limit_bytes) derived from the local device."""
    vmem_cap = 64 * 1024 * 1024            # conservative default (v7x physical)
    try:
        info = pltpu.get_tpu_info()
        vmem_cap = int(getattr(info, "vmem_capacity_bytes", vmem_cap))
    except Exception:
        pass
    kind = ""
    try:
        kind = jax.devices()[0].device_kind.lower()
    except Exception:
        pass
    multi_tc = ("v7" in kind) or ("tpu7" in kind)   # v7x: 2 TensorCores / chip
    # explicit scoped-VMEM budget: half of physical, never above 64 MiB
    vmem_limit = int(min(vmem_cap // 2, 64 * 1024 * 1024))
    return multi_tc, vmem_limit


def _derive_tm(row_counts, per_row_bytes, const_bytes, vmem_limit, multi_tc,
               cap=1024):
    """Largest 8-aligned row tile whose double-buffered working set fits the VMEM
    budget; only halved (to expose >=2 grid tiles) on multi-TC chips (v7x)."""
    avail = max(vmem_limit // 2 - const_bytes, 8 * per_row_bytes)
    tm = max(8, min(cap, (avail // per_row_bytes) // 8 * 8))
    tm = min(tm, _round_up(max(row_counts), 8))
    if multi_tc:
        while tm >= 16 and sum(-(-n // tm) for n in row_counts) < 2:
            tm = _round_up(tm // 2, 8)
    return int(tm)


# -----------------------------------------------------------------------------
# fused kernel: target concat-with-aug-means tiles + per-type Linear tiles
# -----------------------------------------------------------------------------
def _fused_hgn_kernel(role_ref, tgt_blk_ref, blk_ref, *refs,
                      n_nt, n_aug, A, f_t, E, size_map, inv_A):
    del tgt_blk_ref, blk_ref                 # consumed only by the index maps
    tgt_h_ref = refs[0]
    aug_ref = refs[1]
    x_refs = refs[2:2 + n_nt]
    w_refs = refs[2 + n_nt:2 + 2 * n_nt]
    b_refs = refs[2 + 2 * n_nt:2 + 3 * n_nt]
    o_ref = refs[2 + 3 * n_nt]

    role = role_ref[pl.program_id(0)]

    @pl.when(role == 0)
    def _target_tile():
        # identical_map(concat(h, mean(aug_0), ..., mean(aug_{n_aug-1}))) written as
        # direct sliced stores (no in-kernel concatenate / full-tile relayout).
        o_ref[:, :f_t] = tgt_h_ref[...].astype(o_ref.dtype)
        for k in range(n_aug):
            s = jnp.sum(aug_ref[k * A:(k + 1) * A, :, :].astype(jnp.float32),
                        axis=0)
            o_ref[:, f_t + k * E:f_t + (k + 1) * E] = (s * inv_A).astype(o_ref.dtype)
        if size_map < o_ref.shape[1]:
            # deterministic lane padding (sliced off in the wrapper)
            o_ref[:, size_map:] = jnp.zeros(
                (o_ref.shape[0], o_ref.shape[1] - size_map), o_ref.dtype)

    for t in range(n_nt):
        @pl.when(role == t + 1)
        def _linear_tile(t=t):
            # weights were pre-padded to a 128-lane-multiple output width, so the
            # matmul result / store is a full unmasked (tm, OUT_W) tile.
            acc = jnp.dot(x_refs[t][...], w_refs[t][...],
                          preferred_element_type=jnp.float32)
            o_ref[...] = (acc + b_refs[t][...].astype(jnp.float32)).astype(o_ref.dtype)


# -----------------------------------------------------------------------------
# SimpleHGN_AUG forward (augmentation branch, method='mean'), steps 1-3
# -----------------------------------------------------------------------------
def simple_hgn_aug_forward(node_feats, augmentated_features, augmentated_types,
                           augmentated_num, method, *, target_category,
                           non_target_types, lin_weights, lin_biases, out_width):
    """node_feats: {ntype: [N_ntype, K_ntype]}
    augmentated_features: {aug_type: [>=augmentated_num, N_target, E]}
    lin_weights/lin_biases: per non-target type, pre-transposed [K_t, OUT_W] and
    [1, OUT_W] with the output dim zero-padded to OUT_W (multiple of 128).
    Returns feat_dict (steps 1-3) -- see TODO(synk) above."""
    assert method == "mean", "only method='mean' hot path is implemented"
    assert len(non_target_types) >= 1

    tgt_h = node_feats[target_category]
    N_tgt, f_t = tgt_h.shape
    n_aug = len(augmentated_types)
    A = augmentated_num
    E = augmentated_features[augmentated_types[0]].shape[-1]
    size_map = f_t + n_aug * E
    OUT_W = out_width
    assert OUT_W >= size_map and OUT_W % 128 == 0
    dtype = tgt_h.dtype
    itemsize = jnp.dtype(dtype).itemsize

    xs = [node_feats[nt] for nt in non_target_types]
    Ks = [int(x.shape[1]) for x in xs]
    n_nt = len(xs)
    row_counts = [int(N_tgt)] + [int(x.shape[0]) for x in xs]
    assert min(row_counts) >= 1

    # ---- row tile from the chip's VMEM budget (double-buffered working set) ----
    multi_tc, vmem_limit = _tpu_budget()
    per_row = 2 * itemsize * (f_t + n_aug * A * E + sum(Ks) + OUT_W)
    const_b = 2 * itemsize * sum(K * OUT_W + OUT_W for K in Ks)
    tm = _derive_tm(row_counts, per_row, const_b, vmem_limit, multi_tc)

    # ---- only ROW padding happens in the wrapper (no K-pad / concat of features) -
    def _pad_rows(a, axis):
        n = a.shape[axis]
        pr = _round_up(n, tm)
        if pr == n:
            return a, pr
        pad = [(0, 0)] * a.ndim
        pad[axis] = (0, pr - n)
        return jnp.pad(a, pad), pr

    tgt_h_p, Ntp = _pad_rows(tgt_h, 0)
    # all augmentation tensors -> ONE stacked array / one DMA stream per tile
    aug_stack = jnp.concatenate(
        [augmentated_features[t][:A] for t in augmentated_types], axis=0)
    aug_stack_p, _ = _pad_rows(aug_stack, 1)
    padded = [_pad_rows(x, 0) for x in xs]
    xs_p = [p[0] for p in padded]
    Nps = [p[1] for p in padded]

    n_tgt_tiles = Ntp // tm
    nt_tiles = [p // tm for p in Nps]
    n_tiles = n_tgt_tiles + sum(nt_tiles)

    # ---- static per-tile schedule tables (scalar-prefetched into SMEM) ---------
    role = np.zeros(n_tiles, np.int32)      # 0 = target tile, t+1 = Linear type t
    tgt_blk = np.zeros(n_tiles, np.int32)   # block index into target / aug arrays
    blk = np.zeros((n_nt, n_tiles), np.int32)
    pos = 0
    for j in range(n_tgt_tiles):
        role[pos], tgt_blk[pos] = 0, j
        pos += 1
    for t in range(n_nt):
        for j in range(nt_tiles[t]):
            role[pos] = t + 1
            blk[t, pos] = j
            pos += 1
    # hold block indices for operands a tile does not consume: unchanged indices
    # mean the pipeline never re-fetches them (each input block is DMA'd once).
    for i in range(1, n_tiles):
        if role[i] != 0:
            tgt_blk[i] = tgt_blk[i - 1]
        for t in range(n_nt):
            if role[i] != t + 1:
                blk[t, i] = blk[t, i - 1]
    blk_flat = blk.reshape(-1)

    # ---- index maps (grid index + 3 scalar-prefetch refs) ----------------------
    def _tgt_im(i, role_r, tgt_r, blk_r):
        return (tgt_r[i], 0)

    def _aug_im(i, role_r, tgt_r, blk_r):
        return (0, tgt_r[i], 0)

    def _x_im(t):
        def im(i, role_r, tgt_r, blk_r):
            return (blk_r[t * n_tiles + i], 0)
        return im

    def _const_im(i, role_r, tgt_r, blk_r):
        return (0, 0)

    def _out_im(i, role_r, tgt_r, blk_r):
        return (i, 0)

    in_specs = (
        [pl.BlockSpec((tm, f_t), _tgt_im),
         pl.BlockSpec((n_aug * A, tm, E), _aug_im)]
        + [pl.BlockSpec((tm, Ks[t]), _x_im(t)) for t in range(n_nt)]
        + [pl.BlockSpec((Ks[t], OUT_W), _const_im) for t in range(n_nt)]
        + [pl.BlockSpec((1, OUT_W), _const_im) for t in range(n_nt)])

    kernel = functools.partial(
        _fused_hgn_kernel, n_nt=n_nt, n_aug=n_aug, A=A, f_t=f_t, E=E,
        size_map=size_map, inv_A=1.0 / A)

    out = pl.pallas_call(
        kernel,
        out_shape=jax.ShapeDtypeStruct((n_tiles * tm, OUT_W), dtype),
        grid_spec=pltpu.PrefetchScalarGridSpec(
            num_scalar_prefetch=3,
            grid=(n_tiles,),
            in_specs=in_specs,
            out_specs=pl.BlockSpec((tm, OUT_W), _out_im)),
        compiler_params=pltpu.CompilerParams(
            dimension_semantics=("parallel",),
            vmem_limit_bytes=int(vmem_limit)),
    )(jnp.asarray(role), jnp.asarray(tgt_blk), jnp.asarray(blk_flat),
      tgt_h_p, aug_stack_p, *xs_p, *lin_weights, *lin_biases)

    # ---- per-type results (row padding + lane padding sliced off here) ---------
    feat_dict = {target_category: out[:N_tgt, :size_map]}
    off = n_tgt_tiles * tm
    for t, nt in enumerate(non_target_types):
        feat_dict[nt] = out[off:off + xs[t].shape[0], :size_map]
        off += nt_tiles[t] * tm

    # 4. logits = SimpleHGN(g, feat_dict)[target_category]
    # TODO(synk): SimpleHGN GNN layers were not provided; returning feat_dict.
    return feat_dict


# -----------------------------------------------------------------------------
# Main
# -----------------------------------------------------------------------------
if __name__ == "__main__":
    key = jax.random.PRNGKey(0)

    # config (small, deterministic)
    embedding_size = 8
    arg_argmentation_type = ["metapath", "neighbor"]       # 2 augmentation types
    augmentated_num = 3
    method = "mean"
    feature_sizes = [16, 24, 32]                           # per node type
    category_index = {"paper": 0, "author": 1, "venue": 2}
    target_category = "paper"
    n_nodes = {"paper": 60, "author": 72, "venue": 40}     # non-multiples of the tile
    size_map = embedding_size * len(arg_argmentation_type) + \
        feature_sizes[category_index[target_category]]     # 16 + 2*8 = 32
    non_target_types = [nt for nt in category_index if nt != target_category]

    # node features g.ndata['h'][ntype]
    node_feats = {}
    for ntype, idx in category_index.items():
        key, sub = jax.random.split(key)
        node_feats[ntype] = jax.random.normal(
            sub, (n_nodes[ntype], feature_sizes[idx]), dtype=jnp.float32)

    # augmented features per aug_type: [augmentated_num, N_target, embedding_size]
    augmentated_features = {}
    for aug_type in arg_argmentation_type:
        key, sub = jax.random.split(key)
        augmentated_features[aug_type] = jax.random.normal(
            sub, (augmentated_num, n_nodes[target_category], embedding_size),
            dtype=jnp.float32)

    # look_up_table nn.Linear parameters for non-target node types
    # (deterministic Kaiming-uniform-like init, mirroring nn.Linear defaults)
    params = {}
    for ntype in non_target_types:
        in_dim = feature_sizes[category_index[ntype]]
        bound = 1.0 / (in_dim ** 0.5)
        key, kw, kb = jax.random.split(key, 3)
        W = jax.random.uniform(kw, (size_map, in_dim), jnp.float32, -bound, bound)
        b = jax.random.uniform(kb, (size_map,), jnp.float32, -bound, bound)
        params[ntype] = (W, b)

    # one-time parameter setup: transpose to [K_t, size_map] and zero-pad the
    # output dim to a multiple of 128 lanes so kernel stores are lane-dense.
    OUT_W = _round_up(size_map, 128)
    lin_weights = [jnp.pad(params[nt][0].T, ((0, 0), (0, OUT_W - size_map)))
                   for nt in non_target_types]              # [K_t, OUT_W]
    lin_biases = [jnp.pad(params[nt][1].reshape(1, size_map),
                          ((0, 0), (0, OUT_W - size_map)))
                  for nt in non_target_types]                # [1, OUT_W]

    feat_dict = simple_hgn_aug_forward(
        node_feats, augmentated_features, arg_argmentation_type,
        augmentated_num, method,
        target_category=target_category, non_target_types=non_target_types,
        lin_weights=lin_weights, lin_biases=lin_biases, out_width=OUT_W)
    feat_dict = jax.tree_util.tree_map(jax.block_until_ready, feat_dict)

    # sanity: every projected feature has width size_map
    for ntype, f in feat_dict.items():
        assert f.shape == (n_nodes[ntype], size_map), (ntype, f.shape)

    # cross-check against plain-JAX reference
    ref_target = jnp.concatenate(
        [node_feats[target_category]]
        + [jnp.sum(augmentated_features[t][:augmentated_num], axis=0) / augmentated_num
           for t in arg_argmentation_type], axis=-1)
    assert jnp.allclose(feat_dict[target_category], ref_target, atol=1e-5)
    for ntype, (W, b) in params.items():
        ref = node_feats[ntype] @ W.T + b
        assert jnp.allclose(feat_dict[ntype], ref, atol=1e-4)

    print("KERNEL_OK")
</pallas_src>

<mosaic_0001>
module attributes {stable_mosaic.version = 11 : i64} {
  func.func @_fused_hgn_kernel(%arg0: i32, %arg1: memref<3xi32, #tpu.memory_space<smem>>, %arg2: memref<3xi32, #tpu.memory_space<smem>>, %arg3: memref<6xi32, #tpu.memory_space<smem>>, %arg4: memref<72x16xf32, #tpu.memory_space<vmem>>, %arg5: memref<6x72x8xf32, #tpu.memory_space<vmem>>, %arg6: memref<72x24xf32, #tpu.memory_space<vmem>>, %arg7: memref<72x32xf32, #tpu.memory_space<vmem>>, %arg8: memref<24x128xf32, #tpu.memory_space<vmem>>, %arg9: memref<32x128xf32, #tpu.memory_space<vmem>>, %arg10: memref<1x128xf32, #tpu.memory_space<vmem>>, %arg11: memref<1x128xf32, #tpu.memory_space<vmem>>, %arg12: memref<72x128xf32, #tpu.memory_space<vmem>>) attributes {dimension_semantics = [#tpu.dimension_semantics<parallel>], iteration_bounds = array<i64: 3>, scalar_prefetch = 3 : i64, scratch_operands = 0 : i64, tpu.core_type = #tpu.core_type<tc>, window_params = [{transform_indices = @transform_0, window_bounds = array<i64: 72, 16>}, {transform_indices = @transform_1, window_bounds = array<i64: 6, 72, 8>}, {transform_indices = @transform_2, window_bounds = array<i64: 72, 24>}, {transform_indices = @transform_3, window_bounds = array<i64: 72, 32>}, {pipeline_mode = #tpu.pipeline_mode<synchronous>, transform_indices = @transform_4, window_bounds = array<i64: 24, 128>}, {pipeline_mode = #tpu.pipeline_mode<synchronous>, transform_indices = @transform_5, window_bounds = array<i64: 32, 128>}, {pipeline_mode = #tpu.pipeline_mode<synchronous>, transform_indices = @transform_6, window_bounds = array<i64: 1, 128>}, {pipeline_mode = #tpu.pipeline_mode<synchronous>, transform_indices = @transform_7, window_bounds = array<i64: 1, 128>}, {transform_indices = @transform_8, window_bounds = array<i64: 72, 128>}]} {
    %0 = arith.index_cast %arg0 : i32 to index
    %1 = memref.load %arg1[%0] : memref<3xi32, #tpu.memory_space<smem>>
    %c0_i32 = arith.constant 0 : i32
    %2 = arith.cmpi eq, %1, %c0_i32 : i32
    %3 = arith.extui %2 : i1 to i32
    %c0_i32_0 = arith.constant 0 : i32
    %4 = arith.cmpi ne, %3, %c0_i32_0 : i32
    scf.if %4 {
      %c0 = arith.constant 0 : index
      %c0_3 = arith.constant 0 : index
      %11 = vector.load %arg4[%c0, %c0_3] : memref<72x16xf32, #tpu.memory_space<vmem>>, vector<72x16xf32>
      %c0_4 = arith.constant 0 : index
      %c0_5 = arith.constant 0 : index
      %12 = vector.load %arg12[%c0_4, %c0_5] : memref<72x128xf32, #tpu.memory_space<vmem>>, vector<72x16xf32>
      tpu.vector_store %arg12[%c0_4, %c0_5], %11 {strides = array<i32>} : memref<72x128xf32, #tpu.memory_space<vmem>>, vector<72x16xf32>,
      %c0_6 = arith.constant 0 : index
      %c0_7 = arith.constant 0 : index
      %c0_8 = arith.constant 0 : index
      %13 = vector.load %arg5[%c0_6, %c0_7, %c0_8] : memref<6x72x8xf32, #tpu.memory_space<vmem>>, vector<3x72x8xf32>
      %cst = arith.constant dense<0.000000e+00> : vector<72x8xf32>
      %14 = vector.multi_reduction <add>, %13, %cst [0] : vector<3x72x8xf32> to vector<72x8xf32>
      %cst_9 = arith.constant 0.333333343 : f32
      %15 = vector.broadcast %cst_9 : f32 to vector<72x8xf32>
      %16 = arith.mulf %14, %15 : vector<72x8xf32>
      %c0_10 = arith.constant 0 : index
      %c16 = arith.constant 16 : index
      %17 = vector.load %arg12[%c0_10, %c16] : memref<72x128xf32, #tpu.memory_space<vmem>>, vector<72x8xf32>
      tpu.vector_store %arg12[%c0_10, %c16], %16 {strides = array<i32>} : memref<72x128xf32, #tpu.memory_space<vmem>>, vector<72x8xf32>,
      %c3 = arith.constant 3 : index
      %c0_11 = arith.constant 0 : index
      %c0_12 = arith.constant 0 : index
      %18 = vector.load %arg5[%c3, %c0_11, %c0_12] : memref<6x72x8xf32, #tpu.memory_space<vmem>>, vector<3x72x8xf32>
      %cst_13 = arith.constant dense<0.000000e+00> : vector<72x8xf32>
      %19 = vector.multi_reduction <add>, %18, %cst_13 [0] : vector<3x72x8xf32> to vector<72x8xf32>
      %cst_14 = arith.constant 0.333333343 : f32
      %20 = vector.broadcast %cst_14 : f32 to vector<72x8xf32>
      %21 = arith.mulf %19, %20 : vector<72x8xf32>
      %c0_15 = arith.constant 0 : index
      %c24 = arith.constant 24 : index
      %22 = vector.load %arg12[%c0_15, %c24] : memref<72x128xf32, #tpu.memory_space<vmem>>, vector<72x8xf32>
      tpu.vector_store %arg12[%c0_15, %c24], %21 {strides = array<i32>} : memref<72x128xf32, #tpu.memory_space<vmem>>, vector<72x8xf32>,
      %cst_16 = arith.constant 0.000000e+00 : f32
      %23 = vector.broadcast %cst_16 : f32 to vector<72x96xf32>
      %c0_17 = arith.constant 0 : index
      %c32 = arith.constant 32 : index
      %24 = vector.load %arg12[%c0_17, %c32] : memref<72x128xf32, #tpu.memory_space<vmem>>, vector<72x96xf32>
      tpu.vector_store %arg12[%c0_17, %c32], %23 {strides = array<i32>} : memref<72x128xf32, #tpu.memory_space<vmem>>, vector<72x96xf32>,
    } else {
    }
    %c1_i32 = arith.constant 1 : i32
    %5 = arith.cmpi eq, %1, %c1_i32 : i32
    %6 = arith.extui %5 : i1 to i32
    %c0_i32_1 = arith.constant 0 : i32
    %7 = arith.cmpi ne, %6, %c0_i32_1 : i32
    scf.if %7 {
      %c0 = arith.constant 0 : index
      %c0_3 = arith.constant 0 : index
      %11 = vector.load %arg6[%c0, %c0_3] : memref<72x24xf32, #tpu.memory_space<vmem>>, vector<72x24xf32>
      %c0_4 = arith.constant 0 : index
      %c0_5 = arith.constant 0 : index
      %12 = vector.load %arg8[%c0_4, %c0_5] : memref<24x128xf32, #tpu.memory_space<vmem>>, vector<24x128xf32>
      %cst = arith.constant dense<0.000000e+00> : vector<72x128xf32>
      %13 = tpu.matmul %11, %12, %cst {dimension_numbers = #tpu.dot_dimension_numbers<[1], [0], [0], [1], [0, 0, 1, 1], [], []>} : vector<72x24xf32>, vector<24x128xf32>, vector<72x128xf32> -> vector<72x128xf32>
      %c0_6 = arith.constant 0 : index
      %c0_7 = arith.constant 0 : index
      %14 = vector.load %arg10[%c0_6, %c0_7] : memref<1x128xf32, #tpu.memory_space<vmem>>, vector<1x128xf32>
      %15 = vector.broadcast %14 : vector<1x128xf32> to vector<72x128xf32>
      %16 = arith.addf %13, %15 : vector<72x128xf32>
      %c0_8 = arith.constant 0 : index
      %c0_9 = arith.constant 0 : index
      %17 = vector.load %arg12[%c0_8, %c0_9] : memref<72x128xf32, #tpu.memory_space<vmem>>, vector<72x128xf32>
      tpu.vector_store %arg12[%c0_8, %c0_9], %16 {strides = array<i32>} : memref<72x128xf32, #tpu.memory_space<vmem>>, vector<72x128xf32>,
    } else {
    }
    %c2_i32 = arith.constant 2 : i32
    %8 = arith.cmpi eq, %1, %c2_i32 : i32
    %9 = arith.extui %8 : i1 to i32
    %c0_i32_2 = arith.constant 0 : i32
    %10 = arith.cmpi ne, %9, %c0_i32_2 : i32
    scf.if %10 {
      %c0 = arith.constant 0 : index
      %c0_3 = arith.constant 0 : index
      %11 = vector.load %arg7[%c0, %c0_3] : memref<72x32xf32, #tpu.memory_space<vmem>>, vector<72x32xf32>
      %c0_4 = arith.constant 0 : index
      %c0_5 = arith.constant 0 : index
      %12 = vector.load %arg9[%c0_4, %c0_5] : memref<32x128xf32, #tpu.memory_space<vmem>>, vector<32x128xf32>
      %cst = arith.constant dense<0.000000e+00> : vector<72x128xf32>
      %13 = tpu.matmul %11, %12, %cst {dimension_numbers = #tpu.dot_dimension_numbers<[1], [0], [0], [1], [0, 0, 1, 1], [], []>} : vector<72x32xf32>, vector<32x128xf32>, vector<72x128xf32> -> vector<72x128xf32>
      %c0_6 = arith.constant 0 : index
      %c0_7 = arith.constant 0 : index
      %14 = vector.load %arg11[%c0_6, %c0_7] : memref<1x128xf32, #tpu.memory_space<vmem>>, vector<1x128xf32>
      %15 = vector.broadcast %14 : vector<1x128xf32> to vector<72x128xf32>
      %16 = arith.addf %13, %15 : vector<72x128xf32>
      %c0_8 = arith.constant 0 : index
      %c0_9 = arith.constant 0 : index
      %17 = vector.load %arg12[%c0_8, %c0_9] : memref<72x128xf32, #tpu.memory_space<vmem>>, vector<72x128xf32>
      tpu.vector_store %arg12[%c0_8, %c0_9], %16 {strides = array<i32>} : memref<72x128xf32, #tpu.memory_space<vmem>>, vector<72x128xf32>,
    } else {
    }
    return
  }
  func.func @transform_0(%arg0: i32, %arg1: memref<3xi32, #tpu.memory_space<smem>>, %arg2: memref<3xi32, #tpu.memory_space<smem>>, %arg3: memref<6xi32, #tpu.memory_space<smem>>) -> (i32, i32) {
    %0 = arith.index_cast %arg0 : i32 to index
    %1 = memref.load %arg2[%0] : memref<3xi32, #tpu.memory_space<smem>>
    %c0_i32 = arith.constant 0 : i32
    %c0_i32_0 = arith.constant 0 : i32
    return %1, %c0_i32 : i32, i32
  }
  func.func @transform_1(%arg0: i32, %arg1: memref<3xi32, #tpu.memory_space<smem>>, %arg2: memref<3xi32, #tpu.memory_space<smem>>, %arg3: memref<6xi32, #tpu.memory_space<smem>>) -> (i32, i32, i32) {
    %0 = arith.index_cast %arg0 : i32 to index
    %1 = memref.load %arg2[%0] : memref<3xi32, #tpu.memory_space<smem>>
    %c0_i32 = arith.constant 0 : i32
    %c0_i32_0 = arith.constant 0 : i32
    %c0_i32_1 = arith.constant 0 : i32
    return %c0_i32, %1, %c0_i32_0 : i32, i32, i32
  }
  func.func @transform_2(%arg0: i32, %arg1: memref<3xi32, #tpu.memory_space<smem>>, %arg2: memref<3xi32, #tpu.memory_space<smem>>, %arg3: memref<6xi32, #tpu.memory_space<smem>>) -> (i32, i32) {
    %c0_i32 = arith.constant 0 : i32
    %0 = arith.addi %c0_i32, %arg0 : i32
    %1 = arith.index_cast %0 : i32 to index
    %2 = memref.load %arg3[%1] : memref<6xi32, #tpu.memory_space<smem>>
    %c0_i32_0 = arith.constant 0 : i32
    %c0_i32_1 = arith.constant 0 : i32
    return %2, %c0_i32_0 : i32, i32
  }
  func.func @transform_3(%arg0: i32, %arg1: memref<3xi32, #tpu.memory_space<smem>>, %arg2: memref<3xi32, #tpu.memory_space<smem>>, %arg3: memref<6xi32, #tpu.memory_space<smem>>) -> (i32, i32) {
    %c3_i32 = arith.constant 3 : i32
    %0 = arith.addi %c3_i32, %arg0 : i32
    %1 = arith.index_cast %0 : i32 to index
    %2 = memref.load %arg3[%1] : memref<6xi32, #tpu.memory_space<smem>>
    %c0_i32 = arith.constant 0 : i32
    %c0_i32_0 = arith.constant 0 : i32
    return %2, %c0_i32 : i32, i32
  }
  func.func @transform_4(%arg0: i32, %arg1: memref<3xi32, #tpu.memory_space<smem>>, %arg2: memref<3xi32, #tpu.memory_space<smem>>, %arg3: memref<6xi32, #tpu.memory_space<smem>>) -> (i32, i32) {
    %c0_i32 = arith.constant 0 : i32
    %c0_i32_0 = arith.constant 0 : i32
    %c0_i32_1 = arith.constant 0 : i32
    return %c0_i32, %c0_i32_0 : i32, i32
  }
  func.func @transform_5(%arg0: i32, %arg1: memref<3xi32, #tpu.memory_space<smem>>, %arg2: memref<3xi32, #tpu.memory_space<smem>>, %arg3: memref<6xi32, #tpu.memory_space<smem>>) -> (i32, i32) {
    %c0_i32 = arith.constant 0 : i32
    %c0_i32_0 = arith.constant 0 : i32
    %c0_i32_1 = arith.constant 0 : i32
    return %c0_i32, %c0_i32_0 : i32, i32
  }
  func.func @transform_6(%arg0: i32, %arg1: memref<3xi32, #tpu.memory_space<smem>>, %arg2: memref<3xi32, #tpu.memory_space<smem>>, %arg3: memref<6xi32, #tpu.memory_space<smem>>) -> (i32, i32) {
    %c0_i32 = arith.constant 0 : i32
    %c0_i32_0 = arith.constant 0 : i32
    %c0_i32_1 = arith.constant 0 : i32
    return %c0_i32, %c0_i32_0 : i32, i32
  }
  func.func @transform_7(%arg0: i32, %arg1: memref<3xi32, #tpu.memory_space<smem>>, %arg2: memref<3xi32, #tpu.memory_space<smem>>, %arg3: memref<6xi32, #tpu.memory_space<smem>>) -> (i32, i32) {
    %c0_i32 = arith.constant 0 : i32
    %c0_i32_0 = arith.constant 0 : i32
    %c0_i32_1 = arith.constant 0 : i32
    return %c0_i32, %c0_i32_0 : i32, i32
  }
  func.func @transform_8(%arg0: i32, %arg1: memref<3xi32, #tpu.memory_space<smem>>, %arg2: memref<3xi32, #tpu.memory_space<smem>>, %arg3: memref<6xi32, #tpu.memory_space<smem>>) -> (i32, i32) {
    %c0_i32 = arith.constant 0 : i32
    %c0_i32_0 = arith.constant 0 : i32
    return %arg0, %c0_i32 : i32, i32
  }
}

</mosaic_0001>

<llo_original>
// kernel: tpu_custom_call.1
$region0: #{tpu_custom_call.1}
  #allocation0 [shape = 'u32[]', space=smem, size = 0x4, offset = 0x4, fixed_abs, tag = 'smem constant byte address 0x4 - core index']
  #allocation1 [shape = 'u32[144,128]{1,0:T(1,128)}', space=vmem, size = 0x12000, scoped, tag = 'internal scratch']
  #allocation2 [shape = 's32[1]{0}', space=sflag, size = 0x4, scoped, tag = 'scoped memory for tpu_custom_call.1']
  #allocation3 [shape = 'u8[512]{0}', space=smem, size = 0x200, scoped, tag = 'prefetched SMEM operand 0']
  #allocation4 [shape = 'u8[512]{0}', space=smem, size = 0x200, scoped, tag = 'prefetched SMEM operand 1']
  #allocation5 [shape = 'u8[512]{0}', space=smem, size = 0x200, scoped, tag = 'prefetched SMEM operand 2']
  %s0 = inlined_call_operand.vmem [shape: s32[3], index: 0, kind: input, shape index: {}]
  %s1 = inlined_call_operand.vmem [shape: s32[3], index: 1, kind: input, shape index: {}]
  %s2 = inlined_call_operand.vmem [shape: s32[6], index: 2, kind: input, shape index: {}]
  %s3 = inlined_call_operand.vmem [shape: f32[72,16], index: 3, kind: input, shape index: {}]
  %s4 = inlined_call_operand.vmem [shape: f32[6,72,8], index: 4, kind: input, shape index: {}]
  %s5 = inlined_call_operand.vmem [shape: f32[72,24], index: 5, kind: input, shape index: {}]
  %s6 = inlined_call_operand.vmem [shape: f32[72,32], index: 6, kind: input, shape index: {}]
  %s7 = inlined_call_operand.vmem [shape: f32[24,128], index: 7, kind: input, shape index: {}]
  %s8 = inlined_call_operand.vmem [shape: f32[32,128], index: 8, kind: input, shape index: {}]
  %s9 = inlined_call_operand.vmem [shape: f32[1,128], index: 9, kind: input, shape index: {}]
  %s10 = inlined_call_operand.vmem [shape: f32[1,128], index: 10, kind: input, shape index: {}]
  %s11 = inlined_call_operand.hbm [shape: f32[216,128], index: 11, kind: output, shape index: {}]
  %s12 = sld [smem:[#allocation0]]
  $region77: #{tpu_custom_call.1} parent=0
    _
  %s14 = ssub.s32 1, %s12
  %s15 = scalar_select 0, %s14, %s12
  %s16 = sshll.u32 %s0, 4
  %s17 = int_to_ptr.vmem [resolvable:$true] %s16
  %19 = dma.vmem_to_smem %s17, 16, [#allocation3], [#allocation2]
  %s20 = sshll.u32 %s1, 4
  %s21 = int_to_ptr.vmem [resolvable:$true] %s20
  %23 = dma.vmem_to_smem %s21, 16, [#allocation4], [#allocation2]
  %s24 = sshll.u32 %s2, 4
  %s25 = int_to_ptr.vmem [resolvable:$true] %s24
  %27 = dma.vmem_to_smem %s25, 16, [#allocation5], [#allocation2]
  %28 = dma.done [#allocation2], 48
  %29 = sfence
  $region1: #{tpu_custom_call.1} parent=0
    #allocation6 [shape = 'u8[73728]{0}', space=vmem, size = 0x12000, scoped, tag = 'output window, operand 0']
    #allocation7 [shape = 's32[2]{0}', space=sflag, size = 0x8, scoped, tag = 'scoped memory for tpu_custom_call.1']
    %30 = vsyncpa [#allocation7], 0
    %s31 = scalar_lea.sflag [#allocation7], 1
    %32 = vsyncpa %s31, 0
    loop: start=0, step=1, limit=5
    $region2: #{tpu_custom_call.1} parent=1 // loop_pre_header
      _
    $region3: #{tpu_custom_call.1} parent=1 // loop_header
      %s34 = sphi 0, %s38
      %p35 = scmp.ge.s32.totalorder %s34, 5
      %s46 = sphi 0, %s48
      %s49 = sphi 0, %s46
      %s50 = sphi 0, %s49
      %s66 = sphi 0, %s50
      %s74 = sphi 0, %s76
      %s77 = sphi 0, %s74
      %s78 = sphi 0, %s77
      %s94 = sphi 0, %s78
      %s102 = sphi 0, %s104
      %s105 = sphi 0, %s102
      %s106 = sphi 0, %s105
      %s122 = sphi 0, %s106
      %s132 = sphi 0, %s134
      %s135 = sphi 0, %s132
      %s136 = sphi 0, %s135
      %s152 = sphi 0, %s136
      %s156 = sphi 0, %s156
      %s158 = sphi 0, %s156
      %s159 = sphi 0, %s158
      %s173 = sphi 0, %s159
      %s177 = sphi 0, %s177
      %s179 = sphi 0, %s177
      %s180 = sphi 0, %s179
      %s194 = sphi 0, %s180
      %s198 = sphi 0, %s198
      %s200 = sphi 0, %s198
      %s201 = sphi 0, %s200
      %s215 = sphi 0, %s201
      %s219 = sphi 0, %s219
      %s221 = sphi 0, %s219
      %s222 = sphi 0, %s221
      %s236 = sphi 0, %s222
      %s242 = sphi 0, %s244
      %s245 = sphi 0, %s242
      %s246 = sphi 0, %s245
      %s262 = sphi 0, %s246
    $region4: #{tpu_custom_call.1} parent=1 // loop_header_branch
      %37 = sbr.rel (%p35) target = $region8
    $region5: #{tpu_custom_call.1} parent=1 // loop_body
      %s39 = ssub.s32 %s34, 1
      %s40 = ssub.s32 %s34, 2
      %s41 = sadd.s32 %s34, 1
      %s42 = sld [smem:[#allocation4 + %s34]]
      %s43 = sld [smem:[#allocation4 + %s41]]
      %s44 = ssub.s32 %s42, %s43
      %p45 = scmp.eq.s32.totalorder %s44, 0
      %s47 = sadd.s32 %s46, 1
      %s48 = scalar_select %p45, %s46, %s47
      %p51 = pneg %p45
      %p52 = scmp.eq.s32.totalorder %s34, 2
      %p53 = por %p51, %p52
      %p54 = scmp.ne.s32.totalorder %s46, %s49
      %p55 = scmp.eq.s32.totalorder %s34, 0
      %p56 = por %p54, %p55
      %p57 = scmp.ne.s32.totalorder %s46, %s49
      %p58 = scmp.eq.s32.totalorder %s39, 2
      %p59 = por %p57, %p58
      %p60 = scmp.ne.s32.totalorder %s49, %s50
      %p61 = scmp.eq.s32.totalorder %s39, 0
      %p62 = por %p60, %p61
      %p63 = scmp.ne.s32.totalorder %s49, %s50
      %p64 = scmp.eq.s32.totalorder %s40, 2
      %p65 = por %p63, %p64
      %p67 = scmp.ne.s32.totalorder %s50, %s66
      %p68 = scmp.eq.s32.totalorder %s40, 0
      %p69 = por %p67, %p68
      %s70 = sld [smem:[#allocation4 + %s34]]
      %s71 = sld [smem:[#allocation4 + %s41]]
      %s72 = ssub.s32 %s70, %s71
      %p73 = scmp.eq.s32.totalorder %s72, 0
      %s75 = sadd.s32 %s74, 1
      %s76 = scalar_select %p73, %s74, %s75
      %p79 = pneg %p73
      %p80 = scmp.eq.s32.totalorder %s34, 2
      %p81 = por %p79, %p80
      %p82 = scmp.ne.s32.totalorder %s74, %s77
      %p83 = scmp.eq.s32.totalorder %s34, 0
      %p84 = por %p82, %p83
      %p85 = scmp.ne.s32.totalorder %s74, %s77
      %p86 = scmp.eq.s32.totalorder %s39, 2
      %p87 = por %p85, %p86
      %p88 = scmp.ne.s32.totalorder %s77, %s78
      %p89 = scmp.eq.s32.totalorder %s39, 0
      %p90 = por %p88, %p89
      %p91 = scmp.ne.s32.totalorder %s77, %s78
      %p92 = scmp.eq.s32.totalorder %s40, 2
      %p93 = por %p91, %p92
      %p95 = scmp.ne.s32.totalorder %s78, %s94
      %p96 = scmp.eq.s32.totalorder %s40, 0
      %p97 = por %p95, %p96
      %s98 = sld [smem:[#allocation5 + %s34]]
      %s99 = sld [smem:[#allocation5 + %s41]]
      %s100 = ssub.s32 %s98, %s99
      %p101 = scmp.eq.s32.totalorder %s100, 0
      %s103 = sadd.s32 %s102, 1
      %s104 = scalar_select %p101, %s102, %s103
      %p107 = pneg %p101
      %p108 = scmp.eq.s32.totalorder %s34, 2
      %p109 = por %p107, %p108
      %p110 = scmp.ne.s32.totalorder %s102, %s105
      %p111 = scmp.eq.s32.totalorder %s34, 0
      %p112 = por %p110, %p111
      %p113 = scmp.ne.s32.totalorder %s102, %s105
      %p114 = scmp.eq.s32.totalorder %s39, 2
      %p115 = por %p113, %p114
      %p116 = scmp.ne.s32.totalorder %s105, %s106
      %p117 = scmp.eq.s32.totalorder %s39, 0
      %p118 = por %p116, %p117
      %p119 = scmp.ne.s32.totalorder %s105, %s106
      %p120 = scmp.eq.s32.totalorder %s40, 2
      %p121 = por %p119, %p120
      %p123 = scmp.ne.s32.totalorder %s106, %s122
      %p124 = scmp.eq.s32.totalorder %s40, 0
      %p125 = por %p123, %p124
      %s126 = sadd.s32 %s34, 3
      %s127 = sld [smem:[#allocation5 + %s126]]
      %s128 = sadd.s32 %s41, 3
      %s129 = sld [smem:[#allocation5 + %s128]]
      %s130 = ssub.s32 %s127, %s129
      %p131 = scmp.eq.s32.totalorder %s130, 0
      %s133 = sadd.s32 %s132, 1
      %s134 = scalar_select %p131, %s132, %s133
      %p137 = pneg %p131
      %p138 = scmp.eq.s32.totalorder %s34, 2
      %p139 = por %p137, %p138
      %p140 = scmp.ne.s32.totalorder %s132, %s135
      %p141 = scmp.eq.s32.totalorder %s34, 0
      %p142 = por %p140, %p141
      %p143 = scmp.ne.s32.totalorder %s132, %s135
      %p144 = scmp.eq.s32.totalorder %s39, 2
      %p145 = por %p143, %p144
      %p146 = scmp.ne.s32.totalorder %s135, %s136
      %p147 = scmp.eq.s32.totalorder %s39, 0
      %p148 = por %p146, %p147
      %p149 = scmp.ne.s32.totalorder %s135, %s136
      %p150 = scmp.eq.s32.totalorder %s40, 2
      %p151 = por %p149, %p150
      %p153 = scmp.ne.s32.totalorder %s136, %s152
      %p154 = scmp.eq.s32.totalorder %s40, 0
      %p155 = por %p153, %p154
      %s157 = sadd.s32 %s156, 1
      %p160 = scmp.eq.s32.totalorder %s34, 2
      %p161 = scmp.ne.s32.totalorder %s156, %s158
      %p162 = scmp.eq.s32.totalorder %s34, 0
      %p163 = por %p161, %p162
      %p164 = scmp.ne.s32.totalorder %s156, %s158
      %p165 = scmp.eq.s32.totalorder %s39, 2
      %p166 = por %p164, %p165
      %p167 = scmp.ne.s32.totalorder %s158, %s159
      %p168 = scmp.eq.s32.totalorder %s39, 0
      %p169 = por %p167, %p168
      %p170 = scmp.ne.s32.totalorder %s158, %s159
      %p171 = scmp.eq.s32.totalorder %s40, 2
      %p172 = por %p170, %p171
      %p174 = scmp.ne.s32.totalorder %s159, %s173
      %p175 = scmp.eq.s32.totalorder %s40, 0
      %p176 = por %p174, %p175
      %s178 = sadd.s32 %s177, 1
      %p181 = scmp.eq.s32.totalorder %s34, 2
      %p182 = scmp.ne.s32.totalorder %s177, %s179
      %p183 = scmp.eq.s32.totalorder %s34, 0
      %p184 = por %p182, %p183
      %p185 = scmp.ne.s32.totalorder %s177, %s179
      %p186 = scmp.eq.s32.totalorder %s39, 2
      %p187 = por %p185, %p186
      %p188 = scmp.ne.s32.totalorder %s179, %s180
      %p189 = scmp.eq.s32.totalorder %s39, 0
      %p190 = por %p188, %p189
      %p191 = scmp.ne.s32.totalorder %s179, %s180
      %p192 = scmp.eq.s32.totalorder %s40, 2
      %p193 = por %p191, %p192
      %p195 = scmp.ne.s32.totalorder %s180, %s194
      %p196 = scmp.eq.s32.totalorder %s40, 0
      %p197 = por %p195, %p196
      %s199 = sadd.s32 %s198, 1
      %p202 = scmp.eq.s32.totalorder %s34, 2
      %p203 = scmp.ne.s32.totalorder %s198, %s200
      %p204 = scmp.eq.s32.totalorder %s34, 0
      %p205 = por %p203, %p204
      %p206 = scmp.ne.s32.totalorder %s198, %s200
      %p207 = scmp.eq.s32.totalorder %s39, 2
      %p208 = por %p206, %p207
      %p209 = scmp.ne.s32.totalorder %s200, %s201
      %p210 = scmp.eq.s32.totalorder %s39, 0
      %p211 = por %p209, %p210
      %p212 = scmp.ne.s32.totalorder %s200, %s201
      %p213 = scmp.eq.s32.totalorder %s40, 2
      %p214 = por %p212, %p213
      %p216 = scmp.ne.s32.totalorder %s201, %s215
      %p217 = scmp.eq.s32.totalorder %s40, 0
      %p218 = por %p216, %p217
      %s220 = sadd.s32 %s219, 1
      %p223 = scmp.eq.s32.totalorder %s34, 2
      %p224 = scmp.ne.s32.totalorder %s219, %s221
      %p225 = scmp.eq.s32.totalorder %s34, 0
      %p226 = por %p224, %p225
      %p227 = scmp.ne.s32.totalorder %s219, %s221
      %p228 = scmp.eq.s32.totalorder %s39, 2
      %p229 = por %p227, %p228
      %p230 = scmp.ne.s32.totalorder %s221, %s222
      %p231 = scmp.eq.s32.totalorder %s39, 0
      %p232 = por %p230, %p231
      %p233 = scmp.ne.s32.totalorder %s221, %s222
      %p234 = scmp.eq.s32.totalorder %s40, 2
      %p235 = por %p233, %p234
      %p237 = scmp.ne.s32.totalorder %s222, %s236
      %p238 = scmp.eq.s32.totalorder %s40, 0
      %p239 = por %p237, %p238
      %s240 = ssub.s32 %s34, %s41
      %p241 = scmp.eq.s32.totalorder %s240, 0
      %s243 = sadd.s32 %s242, 1
      %s244 = scalar_select %p241, %s242, %s243
      %p247 = pneg %p241
      %p248 = scmp.eq.s32.totalorder %s34, 2
      %p249 = por %p247, %p248
      %p250 = scmp.ne.s32.totalorder %s242, %s245
      %p251 = scmp.eq.s32.totalorder %s34, 0
      %p252 = por %p250, %p251
      %p253 = scmp.ne.s32.totalorder %s242, %s245
      %p254 = scmp.eq.s32.totalorder %s39, 2
      %p255 = por %p253, %p254
      %p256 = scmp.ne.s32.totalorder %s245, %s246
      %p257 = scmp.eq.s32.totalorder %s39, 0
      %p258 = por %p256, %p257
      %p259 = scmp.ne.s32.totalorder %s245, %s246
      %p260 = scmp.eq.s32.totalorder %s40, 2
      %p261 = por %p259, %p260
      %p263 = scmp.ne.s32.totalorder %s246, %s262
      %p264 = scmp.eq.s32.totalorder %s40, 0
      %p265 = por %p263, %p264
      %p266 = scmp.le.s32.totalorder 1, %s34
      %p267 = scmp.lt.s32.totalorder %s34, 4
      %p268 = pnand %p266, %p267
      %p269 = pneg %p268
      // Predicated region
      $region9: #{tpu_custom_call.1} parent=5 // pred_check
        _
      $region10: #{tpu_custom_call.1} parent=5 // pred_check_branch
        %271 = sbr.rel (%p268) target = $region12
      $region11: #{tpu_custom_call.1} parent=5 // pred_region
        %s272 = ssub.s32 %s34, 1
        // Predicated region
        $region13: #{tpu_custom_call.1} parent=11 // pred_check
          %p273 = pneg %p169
        $region14: #{tpu_custom_call.1} parent=11 // pred_check_branch
          %275 = sbr.rel (%p273) target = $region16
        $region15: #{tpu_custom_call.1} parent=11 // pred_region
          _
        $region16: #{tpu_custom_call.1} parent=11 // pred_fallthru
          _
        // Predicated region
        $region17: #{tpu_custom_call.1} parent=11 // pred_check
          %p276 = pneg %p190
        $region18: #{tpu_custom_call.1} parent=11 // pred_check_branch
          %278 = sbr.rel (%p276) target = $region20
        $region19: #{tpu_custom_call.1} parent=11 // pred_region
          _
        $region20: #{tpu_custom_call.1} parent=11 // pred_fallthru
          _
        // Predicated region
        $region21: #{tpu_custom_call.1} parent=11 // pred_check
          %p279 = pneg %p211
        $region22: #{tpu_custom_call.1} parent=11 // pred_check_branch
          %281 = sbr.rel (%p279) target = $region24
        $region23: #{tpu_custom_call.1} parent=11 // pred_region
          _
        $region24: #{tpu_custom_call.1} parent=11 // pred_fallthru
          _
        // Predicated region
        $region25: #{tpu_custom_call.1} parent=11 // pred_check
          %p282 = pneg %p232
        $region26: #{tpu_custom_call.1} parent=11 // pred_check_branch
          %284 = sbr.rel (%p282) target = $region28
        $region27: #{tpu_custom_call.1} parent=11 // pred_region
          _
        $region28: #{tpu_custom_call.1} parent=11 // pred_fallthru
          _
      $region12: #{tpu_custom_call.1} parent=5 // pred_fallthru
        _
      %p285 = scmp.lt.s32.totalorder %s34, 3
      // Predicated region
      $region29: #{tpu_custom_call.1} parent=5 // pred_check
        %p286 = pneg %p285
      $region30: #{tpu_custom_call.1} parent=5 // pred_check_branch
        %288 = sbr.rel (%p286) target = $region32
      $region31: #{tpu_custom_call.1} parent=5 // pred_region
        // Predicated region
        $region33: #{tpu_custom_call.1} parent=31 // pred_check
          %p289 = pneg %p56
        $region34: #{tpu_custom_call.1} parent=31 // pred_check_branch
          %291 = sbr.rel (%p289) target = $region36
        $region35: #{tpu_custom_call.1} parent=31 // pred_region
          %s292 = sld [smem:[#allocation4 + %s34]]
          %s293 = smul.u32 9, %s292
          %p294 = scmp.lt.s32.totalorder %s293, 8
          %s295 = scalar_select %p294, %s293, 8
          %s296 = smul.addr %s295, 8
          %s297 = scalar_lea.vmem %s3, %s296
          %s298 = sld [smem:[#allocation4 + %s34]]
          %s299 = smul.u32 9, %s298
        $region36: #{tpu_custom_call.1} parent=31 // pred_fallthru
          _
        // Predicated region
        $region37: #{tpu_custom_call.1} parent=31 // pred_check
          %p300 = pneg %p84
        $region38: #{tpu_custom_call.1} parent=31 // pred_check_branch
          %302 = sbr.rel (%p300) target = $region40
        $region39: #{tpu_custom_call.1} parent=31 // pred_region
          %s303 = sld [smem:[#allocation4 + %s34]]
          %s304 = smul.u32 9, %s303
          %p305 = scmp.lt.s32.totalorder %s304, 8
          %s306 = scalar_select %p305, %s304, 8
          %s307 = smul.addr %s306, 8
          %s308 = scalar_lea.vmem %s4, %s307
          %s309 = sld [smem:[#allocation4 + %s34]]
          %s310 = smul.u32 9, %s309
        $region40: #{tpu_custom_call.1} parent=31 // pred_fallthru
          _
        // Predicated region
        $region41: #{tpu_custom_call.1} parent=31 // pred_check
          %p311 = pneg %p112
        $region42: #{tpu_custom_call.1} parent=31 // pred_check_branch
          %313 = sbr.rel (%p311) target = $region44
        $region43: #{tpu_custom_call.1} parent=31 // pred_region
          %s314 = sld [smem:[#allocation5 + %s34]]
          %s315 = smul.u32 9, %s314
          %p316 = scmp.lt.s32.totalorder %s315, 8
          %s317 = scalar_select %p316, %s315, 8
          %s318 = smul.addr %s317, 8
          %s319 = scalar_lea.vmem %s5, %s318
          %s320 = sld [smem:[#allocation5 + %s34]]
          %s321 = smul.u32 9, %s320
        $region44: #{tpu_custom_call.1} parent=31 // pred_fallthru
          _
        // Predicated region
        $region45: #{tpu_custom_call.1} parent=31 // pred_check
          %p322 = pneg %p142
        $region46: #{tpu_custom_call.1} parent=31 // pred_check_branch
          %324 = sbr.rel (%p322) target = $region48
        $region47: #{tpu_custom_call.1} parent=31 // pred_region
          %s325 = sadd.s32 %s34, 3
          %s326 = sld [smem:[#allocation5 + %s325]]
          %s327 = smul.u32 9, %s326
          %p328 = scmp.lt.s32.totalorder %s327, 8
          %s329 = scalar_select %p328, %s327, 8
          %s330 = smul.addr %s329, 8
          %s331 = scalar_lea.vmem %s6, %s330
          %s332 = sadd.s32 %s34, 3
          %s333 = sld [smem:[#allocation5 + %s332]]
          %s334 = smul.u32 9, %s333
        $region48: #{tpu_custom_call.1} parent=31 // pred_fallthru
          _
      $region32: #{tpu_custom_call.1} parent=5 // pred_fallthru
        _
      %p335 = scmp.le.s32.totalorder 1, %s34
      %p336 = scmp.lt.s32.totalorder %s34, 4
      %p337 = pnand %p335, %p336
      %p338 = pneg %p337
      // Predicated region
      $region49: #{tpu_custom_call.1} parent=5 // pred_check
        _
      $region50: #{tpu_custom_call.1} parent=5 // pred_check_branch
        %340 = sbr.rel (%p337) target = $region52
      $region51: #{tpu_custom_call.1} parent=5 // pred_region
        %s341 = ssub.s32 %s34, 1
        %s342 = sld [smem:[#allocation4 + %s39]]
        %s343 = smul.u32 9, %s342
        %p344 = scmp.lt.s32.totalorder %s343, 8
        %s345 = scalar_select %p344, %s343, 8
        %s346 = smul.addr %s345, 8
        %s347 = scalar_lea.vmem %s3, %s346
        %p348 = pneg %p62
        %p349 = pneg %p59
        %s350 = sld [smem:[#allocation4 + %s39]]
        %s351 = smul.u32 9, %s350
        %p352 = scmp.lt.s32.totalorder %s351, 8
        %s353 = scalar_select %p352, %s351, 8
        %s354 = smul.addr %s353, 8
        %s355 = scalar_lea.vmem %s4, %s354
        %p356 = pneg %p90
        %p357 = pneg %p87
        %s358 = sld [smem:[#allocation5 + %s39]]
        %s359 = smul.u32 9, %s358
        %p360 = scmp.lt.s32.totalorder %s359, 8
        %s361 = scalar_select %p360, %s359, 8
        %s362 = smul.addr %s361, 8
        %s363 = scalar_lea.vmem %s5, %s362
        %p364 = pneg %p118
        %p365 = pneg %p115
        %s366 = sadd.s32 %s39, 3
        %s367 = sld [smem:[#allocation5 + %s366]]
        %s368 = smul.u32 9, %s367
        %p369 = scmp.lt.s32.totalorder %s368, 8
        %s370 = scalar_select %p369, %s368, 8
        %s371 = smul.addr %s370, 8
        %s372 = scalar_lea.vmem %s6, %s371
        %p373 = pneg %p148
        %p374 = pneg %p145
        %p375 = pneg %p169
        %p376 = pneg %p166
        %p377 = pneg %p190
        %p378 = pneg %p187
        %p379 = pneg %p211
        %p380 = pneg %p208
        %p381 = pneg %p232
        %p382 = pneg %p229
        %p383 = pneg %p258
        %p384 = pneg %p255
        %s385 = sand.u32 %s245, 1
        %s386 = scalar_lea.sflag [#allocation7], %s385
        %s387 = sand.u32 %s245, 1
        %s388 = smul.addr %s387, 72
        %s389 = scalar_lea.vmem [#allocation6], %s388
        %s390 = sld [smem:[#allocation4 + %s39]]
        %s391 = smul.u32 9, %s390
        %p392 = scmp.lt.s32.totalorder %s391, 8
        %s393 = scalar_select %p392, %s391, 8
        %s394 = smul.addr %s393, 8
        %s395 = scalar_lea.vmem %s3, %s394
        %s396 = sld [smem:[#allocation4 + %s39]]
        %s397 = smul.u32 9, %s396
        %s398 = sld [smem:[#allocation4 + %s39]]
        %s399 = smul.u32 9, %s398
        %p400 = scmp.lt.s32.totalorder %s399, 8
        %s401 = scalar_select %p400, %s399, 8
        %s402 = smul.addr %s401, 8
        %s403 = scalar_lea.vmem %s4, %s402
        %s404 = sld [smem:[#allocation4 + %s39]]
        %s405 = smul.u32 9, %s404
        %s406 = sld [smem:[#allocation5 + %s39]]
        %s407 = smul.u32 9, %s406
        %p408 = scmp.lt.s32.totalorder %s407, 8
        %s409 = scalar_select %p408, %s407, 8
        %s410 = smul.addr %s409, 8
        %s411 = scalar_lea.vmem %s5, %s410
        %s412 = sld [smem:[#allocation5 + %s39]]
        %s413 = smul.u32 9, %s412
        %s414 = sadd.s32 %s39, 3
        %s415 = sld [smem:[#allocation5 + %s414]]
        %s416 = smul.u32 9, %s415
        %p417 = scmp.lt.s32.totalorder %s416, 8
        %s418 = scalar_select %p417, %s416, 8
        %s419 = smul.addr %s418, 8
        %s420 = scalar_lea.vmem %s6, %s419
        %s421 = sadd.s32 %s39, 3
        %s422 = sld [smem:[#allocation5 + %s421]]
        %s423 = smul.u32 9, %s422
        %s424 = smul.u32 9, %s39
        %s425 = sld [smem:[#allocation3 + %s39]]
        %p426 = scmp.eq.s32.totalorder %s425, 0
        // Predicated region
        $region53: #{tpu_custom_call.1} parent=51 // pred_check
          %p427 = pneg %p426
        $region54: #{tpu_custom_call.1} parent=51 // pred_check_branch
          %429 = sbr.rel (%p427) target = $region56
        $region55: #{tpu_custom_call.1} parent=51 // pred_region
          %v430 = vld [vmem:[%s395] sm:$0xff]
          %v431 = vld [vmem:[%s395 + $0x8] sm:$0xff]
          %v432 = vld [vmem:[%s395 + $0x10] sm:$0xff]
          %v433 = vld [vmem:[%s395 + $0x18] sm:$0xff]
          %v434 = vld [vmem:[%s395 + $0x20] sm:$0xff]
          %v435 = vld [vmem:[%s395 + $0x28] sm:$0xff]
          %v436 = vld [vmem:[%s395 + $0x30] sm:$0xff]
          %v437 = vld [vmem:[%s395 + $0x38] sm:$0xff]
          %v438 = vld [vmem:[%s395 + $0x40] sm:$0xff]
          %vm439 = vcmask 130048
          %440 = vst.msk [vmem:[%s389] sm:$0xff] %vm439, %v430
          %441 = vst.msk [vmem:[%s389 + $0x8] sm:$0xff] %vm439, %v431
          %442 = vst.msk [vmem:[%s389 + $0x10] sm:$0xff] %vm439, %v432
          %443 = vst.msk [vmem:[%s389 + $0x18] sm:$0xff] %vm439, %v433
          %444 = vst.msk [vmem:[%s389 + $0x20] sm:$0xff] %vm439, %v434
          %445 = vst.msk [vmem:[%s389 + $0x28] sm:$0xff] %vm439, %v435
          %446 = vst.msk [vmem:[%s389 + $0x30] sm:$0xff] %vm439, %v436
          %447 = vst.msk [vmem:[%s389 + $0x38] sm:$0xff] %vm439, %v437
          %448 = vst.msk [vmem:[%s389 + $0x40] sm:$0xff] %vm439, %v438
          %v449 = vld [vmem:[%s403] sm:$0xff]
          %v450 = vld [vmem:[%s403 + $0x8] sm:$0xff]
          %v451 = vld [vmem:[%s403 + $0x10] sm:$0xff]
          %v452 = vld [vmem:[%s403 + $0x18] sm:$0xff]
          %v453 = vld [vmem:[%s403 + $0x20] sm:$0xff]
          %v454 = vld [vmem:[%s403 + $0x28] sm:$0xff]
          %v455 = vld [vmem:[%s403 + $0x30] sm:$0xff]
          %v456 = vld [vmem:[%s403 + $0x38] sm:$0xff]
          %v457 = vld [vmem:[%s403 + $0x40] sm:$0xff]
          %v458 = vld [vmem:[%s403 + $0x48] sm:$0xff]
          %v459 = vld [vmem:[%s403 + $0x50] sm:$0xff]
          %v460 = vld [vmem:[%s403 + $0x58] sm:$0xff]
          %v461 = vld [vmem:[%s403 + $0x60] sm:$0xff]
          %v462 = vld [vmem:[%s403 + $0x68] sm:$0xff]
          %v463 = vld [vmem:[%s403 + $0x70] sm:$0xff]
          %v464 = vld [vmem:[%s403 + $0x78] sm:$0xff]
          %v465 = vld [vmem:[%s403 + $0x80] sm:$0xff]
          %v466 = vld [vmem:[%s403 + $0x88] sm:$0xff]
          %v467 = vld [vmem:[%s403 + $0x90] sm:$0xff]
          %v468 = vld [vmem:[%s403 + $0x98] sm:$0xff]
          %v469 = vld [vmem:[%s403 + $0xa0] sm:$0xff]
          %v470 = vld [vmem:[%s403 + $0xa8] sm:$0xff]
          %v471 = vld [vmem:[%s403 + $0xb0] sm:$0xff]
          %v472 = vld [vmem:[%s403 + $0xb8] sm:$0xff]
          %v473 = vld [vmem:[%s403 + $0xc0] sm:$0xff]
          %v474 = vld [vmem:[%s403 + $0xc8] sm:$0xff]
          %v475 = vld [vmem:[%s403 + $0xd0] sm:$0xff]
          %vm476 = vcmask 64512
          %v477 = vsel %vm476, %v449, 0.0
          %v478 = vsel %vm476, %v458, 0.0
          %v479 = vadd.f32 %v477, %v478
          %v480 = vsel %vm476, %v467, 0.0
          %v481 = vadd.f32 %v479, %v480
          %v482 = vsel %vm476, %v450, 0.0
          %v483 = vsel %vm476, %v459, 0.0
          %v484 = vadd.f32 %v482, %v483
          %v485 = vsel %vm476, %v468, 0.0
          %v486 = vadd.f32 %v484, %v485
          %v487 = vsel %vm476, %v451, 0.0
          %v488 = vsel %vm476, %v460, 0.0
          %v489 = vadd.f32 %v487, %v488
          %v490 = vsel %vm476, %v469, 0.0
          %v491 = vadd.f32 %v489, %v490
          %v492 = vsel %vm476, %v452, 0.0
          %v493 = vsel %vm476, %v461, 0.0
          %v494 = vadd.f32 %v492, %v493
          %v495 = vsel %vm476, %v470, 0.0
          %v496 = vadd.f32 %v494, %v495
          %v497 = vsel %vm476, %v453, 0.0
          %v498 = vsel %vm476, %v462, 0.0
          %v499 = vadd.f32 %v497, %v498
          %v500 = vsel %vm476, %v471, 0.0
          %v501 = vadd.f32 %v499, %v500
          %v502 = vsel %vm476, %v454, 0.0
          %v503 = vsel %vm476, %v463, 0.0
          %v504 = vadd.f32 %v502, %v503
          %v505 = vsel %vm476, %v472, 0.0
          %v506 = vadd.f32 %v504, %v505
          %v507 = vsel %vm476, %v455, 0.0
          %v508 = vsel %vm476, %v464, 0.0
          %v509 = vadd.f32 %v507, %v508
          %v510 = vsel %vm476, %v473, 0.0
          %v511 = vadd.f32 %v509, %v510
          %v512 = vsel %vm476, %v456, 0.0
          %v513 = vsel %vm476, %v465, 0.0
          %v514 = vadd.f32 %v512, %v513
          %v515 = vsel %vm476, %v474, 0.0
          %v516 = vadd.f32 %v514, %v515
          %v517 = vsel %vm476, %v457, 0.0
          %v518 = vsel %vm476, %v466, 0.0
          %v519 = vadd.f32 %v517, %v518
          %v520 = vsel %vm476, %v475, 0.0
          %v521 = vadd.f32 %v519, %v520
          %v522 = vmul.f32 %v481, 0.33333334
          %v523 = vmul.f32 %v486, 0.33333334
          %v524 = vmul.f32 %v491, 0.33333334
          %v525 = vmul.f32 %v496, 0.33333334
          %v526 = vmul.f32 %v501, 0.33333334
          %v527 = vmul.f32 %v506, 0.33333334
          %v528 = vmul.f32 %v511, 0.33333334
          %v529 = vmul.f32 %v516, 0.33333334
          %v530 = vmul.f32 %v521, 0.33333334
          %540 = vrot.lane.b32.xlu0 %v522, 16
          %v541 = vpop.permute.xlu0 %540
          %542 = vrot.lane.b32.xlu0 %v523, 16
          %v543 = vpop.permute.xlu0 %542
          %544 = vrot.lane.b32.xlu0 %v524, 16
          %v545 = vpop.permute.xlu0 %544
          %546 = vrot.lane.b32.xlu0 %v525, 16
          %v547 = vpop.permute.xlu0 %546
          %548 = vrot.lane.b32.xlu0 %v526, 16
          %v549 = vpop.permute.xlu0 %548
          %550 = vrot.lane.b32.xlu0 %v527, 16
          %v551 = vpop.permute.xlu0 %550
          %552 = vrot.lane.b32.xlu0 %v528, 16
          %v553 = vpop.permute.xlu0 %552
          %554 = vrot.lane.b32.xlu0 %v529, 16
          %v555 = vpop.permute.xlu0 %554
          %556 = vrot.lane.b32.xlu0 %v530, 16
          %v557 = vpop.permute.xlu0 %556
          %vm567 = vcmask 195712
          %568 = vst.msk [vmem:[%s389] sm:$0xff] %vm567, %v541
          %569 = vst.msk [vmem:[%s389 + $0x8] sm:$0xff] %vm567, %v543
          %570 = vst.msk [vmem:[%s389 + $0x10] sm:$0xff] %vm567, %v545
          %571 = vst.msk [vmem:[%s389 + $0x18] sm:$0xff] %vm567, %v547
          %572 = vst.msk [vmem:[%s389 + $0x20] sm:$0xff] %vm567, %v549
          %573 = vst.msk [vmem:[%s389 + $0x28] sm:$0xff] %vm567, %v551
          %574 = vst.msk [vmem:[%s389 + $0x30] sm:$0xff] %vm567, %v553
          %575 = vst.msk [vmem:[%s389 + $0x38] sm:$0xff] %vm567, %v555
          %576 = vst.msk [vmem:[%s389 + $0x40] sm:$0xff] %vm567, %v557
          %s577 = scalar_lea.vmem %s403, 216
          %v578 = vld [vmem:[%s577] sm:$0xff]
          %v579 = vld [vmem:[%s577 + $0x8] sm:$0xff]
          %v580 = vld [vmem:[%s577 + $0x10] sm:$0xff]
          %v581 = vld [vmem:[%s577 + $0x18] sm:$0xff]
          %v582 = vld [vmem:[%s577 + $0x20] sm:$0xff]
          %v583 = vld [vmem:[%s577 + $0x28] sm:$0xff]
          %v584 = vld [vmem:[%s577 + $0x30] sm:$0xff]
          %v585 = vld [vmem:[%s577 + $0x38] sm:$0xff]
          %v586 = vld [vmem:[%s577 + $0x40] sm:$0xff]
          %v587 = vld [vmem:[%s577 + $0x48] sm:$0xff]
          %v588 = vld [vmem:[%s577 + $0x50] sm:$0xff]
          %v589 = vld [vmem:[%s577 + $0x58] sm:$0xff]
          %v590 = vld [vmem:[%s577 + $0x60] sm:$0xff]
          %v591 = vld [vmem:[%s577 + $0x68] sm:$0xff]
          %v592 = vld [vmem:[%s577 + $0x70] sm:$0xff]
          %v593 = vld [vmem:[%s577 + $0x78] sm:$0xff]
          %v594 = vld [vmem:[%s577 + $0x80] sm:$0xff]
          %v595 = vld [vmem:[%s577 + $0x88] sm:$0xff]
          %v596 = vld [vmem:[%s577 + $0x90] sm:$0xff]
          %v597 = vld [vmem:[%s577 + $0x98] sm:$0xff]
          %v598 = vld [vmem:[%s577 + $0xa0] sm:$0xff]
          %v599 = vld [vmem:[%s577 + $0xa8] sm:$0xff]
          %v600 = vld [vmem:[%s577 + $0xb0] sm:$0xff]
          %v601 = vld [vmem:[%s577 + $0xb8] sm:$0xff]
          %v602 = vld [vmem:[%s577 + $0xc0] sm:$0xff]
          %v603 = vld [vmem:[%s577 + $0xc8] sm:$0xff]
          %v604 = vld [vmem:[%s577 + $0xd0] sm:$0xff]
          %v605 = vsel %vm476, %v578, 0.0
          %v606 = vsel %vm476, %v587, 0.0
          %v607 = vadd.f32 %v605, %v606
          %v608 = vsel %vm476, %v596, 0.0
          %v609 = vadd.f32 %v607, %v608
          %v610 = vsel %vm476, %v579, 0.0
          %v611 = vsel %vm476, %v588, 0.0
          %v612 = vadd.f32 %v610, %v611
          %v613 = vsel %vm476, %v597, 0.0
          %v614 = vadd.f32 %v612, %v613
          %v615 = vsel %vm476, %v580, 0.0
          %v616 = vsel %vm476, %v589, 0.0
          %v617 = vadd.f32 %v615, %v616
          %v618 = vsel %vm476, %v598, 0.0
          %v619 = vadd.f32 %v617, %v618
          %v620 = vsel %vm476, %v581, 0.0
          %v621 = vsel %vm476, %v590, 0.0
          %v622 = vadd.f32 %v620, %v621
          %v623 = vsel %vm476, %v599, 0.0
          %v624 = vadd.f32 %v622, %v623
          %v625 = vsel %vm476, %v582, 0.0
          %v626 = vsel %vm476, %v591, 0.0
          %v627 = vadd.f32 %v625, %v626
          %v628 = vsel %vm476, %v600, 0.0
          %v629 = vadd.f32 %v627, %v628
          %v630 = vsel %vm476, %v583, 0.0
          %v631 = vsel %vm476, %v592, 0.0
          %v632 = vadd.f32 %v630, %v631
          %v633 = vsel %vm476, %v601, 0.0
          %v634 = vadd.f32 %v632, %v633
          %v635 = vsel %vm476, %v584, 0.0
          %v636 = vsel %vm476, %v593, 0.0
          %v637 = vadd.f32 %v635, %v636
          %v638 = vsel %vm476, %v602, 0.0
          %v639 = vadd.f32 %v637, %v638
          %v640 = vsel %vm476, %v585, 0.0
          %v641 = vsel %vm476, %v594, 0.0
          %v642 = vadd.f32 %v640, %v641
          %v643 = vsel %vm476, %v603, 0.0
          %v644 = vadd.f32 %v642, %v643
          %v645 = vsel %vm476, %v586, 0.0
          %v646 = vsel %vm476, %v595, 0.0
          %v647 = vadd.f32 %v645, %v646
          %v648 = vsel %vm476, %v604, 0.0
          %v649 = vadd.f32 %v647, %v648
          %v650 = vmul.f32 %v609, 0.33333334
          %v651 = vmul.f32 %v614, 0.33333334
          %v652 = vmul.f32 %v619, 0.33333334
          %v653 = vmul.f32 %v624, 0.33333334
          %v654 = vmul.f32 %v629, 0.33333334
          %v655 = vmul.f32 %v634, 0.33333334
          %v656 = vmul.f32 %v639, 0.33333334
          %v657 = vmul.f32 %v644, 0.33333334
          %v658 = vmul.f32 %v649, 0.33333334
          %668 = vrot.lane.b32.xlu0 %v650, 24
          %v669 = vpop.permute.xlu0 %668
          %670 = vrot.lane.b32.xlu0 %v651, 24
          %v671 = vpop.permute.xlu0 %670
          %672 = vrot.lane.b32.xlu0 %v652, 24
          %v673 = vpop.permute.xlu0 %672
          %674 = vrot.lane.b32.xlu0 %v653, 24
          %v675 = vpop.permute.xlu0 %674
          %676 = vrot.lane.b32.xlu0 %v654, 24
          %v677 = vpop.permute.xlu0 %676
          %678 = vrot.lane.b32.xlu0 %v655, 24
          %v679 = vpop.permute.xlu0 %678
          %680 = vrot.lane.b32.xlu0 %v656, 24
          %v681 = vpop.permute.xlu0 %680
          %682 = vrot.lane.b32.xlu0 %v657, 24
          %v683 = vpop.permute.xlu0 %682
          %684 = vrot.lane.b32.xlu0 %v658, 24
          %v685 = vpop.permute.xlu0 %684
          %vm695 = vcmask 261312
          %696 = vst.msk [vmem:[%s389] sm:$0xff] %vm695, %v669
          %697 = vst.msk [vmem:[%s389 + $0x8] sm:$0xff] %vm695, %v671
          %698 = vst.msk [vmem:[%s389 + $0x10] sm:$0xff] %vm695, %v673
          %699 = vst.msk [vmem:[%s389 + $0x18] sm:$0xff] %vm695, %v675
          %700 = vst.msk [vmem:[%s389 + $0x20] sm:$0xff] %vm695, %v677
          %701 = vst.msk [vmem:[%s389 + $0x28] sm:$0xff] %vm695, %v679
          %702 = vst.msk [vmem:[%s389 + $0x30] sm:$0xff] %vm695, %v681
          %703 = vst.msk [vmem:[%s389 + $0x38] sm:$0xff] %vm695, %v683
          %704 = vst.msk [vmem:[%s389 + $0x40] sm:$0xff] %vm695, %v685
          %vm705 = vcmask 1047808
          %706 = vst.msk [vmem:[%s389] sm:$0xff] %vm705, 0.0
          %707 = vst.msk [vmem:[%s389 + $0x8] sm:$0xff] %vm705, 0.0
          %708 = vst.msk [vmem:[%s389 + $0x10] sm:$0xff] %vm705, 0.0
          %709 = vst.msk [vmem:[%s389 + $0x18] sm:$0xff] %vm705, 0.0
          %710 = vst.msk [vmem:[%s389 + $0x20] sm:$0xff] %vm705, 0.0
          %711 = vst.msk [vmem:[%s389 + $0x28] sm:$0xff] %vm705, 0.0
          %712 = vst.msk [vmem:[%s389 + $0x30] sm:$0xff] %vm705, 0.0
          %713 = vst.msk [vmem:[%s389 + $0x38] sm:$0xff] %vm705, 0.0
          %714 = vst.msk [vmem:[%s389 + $0x40] sm:$0xff] %vm705, 0.0
        $region56: #{tpu_custom_call.1} parent=51 // pred_fallthru
          _
        %p715 = scmp.eq.s32.totalorder %s425, 1
        // Predicated region
        $region57: #{tpu_custom_call.1} parent=51 // pred_check
          %p716 = pneg %p715
        $region58: #{tpu_custom_call.1} parent=51 // pred_check_branch
          %718 = sbr.rel (%p716) target = $region60
        $region59: #{tpu_custom_call.1} parent=51 // pred_region
          %v719 = vld [vmem:[%s411] sm:$0xff]
          %v720 = vld [vmem:[%s411 + $0x8] sm:$0xff]
          %v721 = vld [vmem:[%s411 + $0x10] sm:$0xff]
          %v722 = vld [vmem:[%s411 + $0x18] sm:$0xff]
          %v723 = vld [vmem:[%s411 + $0x20] sm:$0xff]
          %v724 = vld [vmem:[%s411 + $0x28] sm:$0xff]
          %v725 = vld [vmem:[%s411 + $0x30] sm:$0xff]
          %v726 = vld [vmem:[%s411 + $0x38] sm:$0xff]
          %v727 = vld [vmem:[%s411 + $0x40] sm:$0xff]
          %v728 = vld [vmem:[%s7] sm:$0xff]
          %v729 = vld [vmem:[%s7 + $0x8] sm:$0xff]
          %v730 = vld [vmem:[%s7 + $0x10] sm:$0xff]
          %v731 = vld [vmem:[%s9] sm:$0x1]
          %v733 = vlaneseq
          %v734 = vshrl.u32 %v733, 7
          %v735 = vsub.s32 0, %v734
          %v736 = vrot.slane %v731, %v735
          %vm738 = vcmask 195584
          %v740 = vsel %vm738, %v719, 0
          %v743 = vsel %vm738, %v720, 0
          %v746 = vsel %vm738, %v721, 0
          %v749 = vsel %vm738, %v722, 0
          %v752 = vsel %vm738, %v723, 0
          %v755 = vsel %vm738, %v724, 0
          %v758 = vsel %vm738, %v725, 0
          %v761 = vsel %vm738, %v726, 0
          %v764 = vsel %vm738, %v727, 0
          %766 = vmatprep.subr.mxu0 0.0
          %767 = vmatpush1.msra.mxu0 0.0
          %768 = vmatprep.subr.mxu0 0.0
          %769 = vmatpush1.msra.mxu0 0.0
          %770 = vmatprep.subr.mxu0 0.0
          %771 = vmatpush1.msra.mxu0 0.0
          %772 = vmatprep.subr.mxu0 0.0
          %773 = vmatpush1.msra.mxu0 0.0
          %774 = vmatprep.subr.mxu0 0.0
          %775 = vmatpush1.msra.mxu0 0.0
          %776 = vmatprep.subr.mxu0 0.0
          %777 = vmatpush1.msra.mxu0 0.0
          %778 = vmatprep.subr.mxu0 0.0
          %779 = vmatpush1.msra.mxu0 0.0
          %780 = vmatprep.subr.mxu0 0.0
          %781 = vmatpush1.msra.mxu0 0.0
          %782 = vmatprep.subr.mxu0 0.0
          %783 = vmatpush1.msra.mxu0 0.0
          %784 = vmatprep.subr.mxu0 0.0
          %785 = vmatpush1.msra.mxu0 0.0
          %786 = vmatprep.subr.mxu0 0.0
          %787 = vmatpush1.msra.mxu0 0.0
          %788 = vmatprep.subr.mxu0 0.0
          %789 = vmatpush1.msra.mxu0 0.0
          %790 = vmatprep.subr.mxu0 0.0
          %791 = vmatpush1.msra.mxu0 0.0
          %792 = vmatprep.subr.mxu0 0.0
          %793 = vmatpush1.msra.mxu0 %v730
          %794 = vmatprep.subr.mxu0 0.0
          %795 = vmatpush1.msra.mxu0 %v729
          %796 = vmatprep.subr.mxu0 0.0
          %797 = vmatpush1.msra.mxu0 %v728
          %798 = vmatprep.subr.mxu0 0.0
          %799 = vmatpush2.msra.mxu0 0.0
          %800 = vmatprep.subr.mxu0 0.0
          %801 = vmatpush2.msra.mxu0 0.0
          %802 = vmatprep.subr.mxu0 0.0
          %803 = vmatpush2.msra.mxu0 0.0
          %804 = vmatprep.subr.mxu0 0.0
          %805 = vmatpush2.msra.mxu0 0.0
          %806 = vmatprep.subr.mxu0 0.0
          %807 = vmatpush2.msra.mxu0 0.0
          %808 = vmatprep.subr.mxu0 0.0
          %809 = vmatpush2.msra.mxu0 0.0
          %810 = vmatprep.subr.mxu0 0.0
          %811 = vmatpush2.msra.mxu0 0.0
          %812 = vmatprep.subr.mxu0 0.0
          %813 = vmatpush2.msra.mxu0 0.0
          %814 = vmatprep.subr.mxu0 0.0
          %815 = vmatpush2.msra.mxu0 0.0
          %816 = vmatprep.subr.mxu0 0.0
          %817 = vmatpush2.msra.mxu0 0.0
          %818 = vmatprep.subr.mxu0 0.0
          %819 = vmatpush2.msra.mxu0 0.0
          %820 = vmatprep.subr.mxu0 0.0
          %821 = vmatpush2.msra.mxu0 0.0
          %822 = vmatprep.subr.mxu0 0.0
          %823 = vmatpush2.msra.mxu0 0.0
          %824 = vmatprep.subr.mxu0 0.0
          %825 = vmatpush2.msra.mxu0 0.0
          %826 = vmatprep.subr.mxu0 0.0
          %827 = vmatpush2.msra.mxu0 0.0
          %828 = vmatprep.subr.mxu0 0.0
          %829 = vmatpush2.msra.mxu0 0.0
          %830 = vmatprep.mubr.f32.mxu0 0.0
          %831 = vmatmul.mubr.f32.gmra.mxu0 %v740
          %v832 = vpop.f32.mrf.mxu0
          %v833 = vadd.f32 %v736, %v832
          %v834 = vpop.f32.mrf.mxu0
          %835 = vmatprep.mubr.f32.mxu0 0.0
          %836 = vmatmul.mubr.f32.gmra.mxu0 %v743
          %v837 = vpop.f32.mrf.mxu0
          %v838 = vadd.f32 %v736, %v837
          %v839 = vpop.f32.mrf.mxu0
          %840 = vmatprep.mubr.f32.mxu0 0.0
          %841 = vmatmul.mubr.f32.gmra.mxu0 %v746
          %v842 = vpop.f32.mrf.mxu0
          %v843 = vadd.f32 %v736, %v842
          %v844 = vpop.f32.mrf.mxu0
          %845 = vmatprep.mubr.f32.mxu0 0.0
          %846 = vmatmul.mubr.f32.gmra.mxu0 %v749
          %v847 = vpop.f32.mrf.mxu0
          %v848 = vadd.f32 %v736, %v847
          %v849 = vpop.f32.mrf.mxu0
          %850 = vmatprep.mubr.f32.mxu0 0.0
          %851 = vmatmul.mubr.f32.gmra.mxu0 %v752
          %v852 = vpop.f32.mrf.mxu0
          %v853 = vadd.f32 %v736, %v852
          %v854 = vpop.f32.mrf.mxu0
          %855 = vmatprep.mubr.f32.mxu0 0.0
          %856 = vmatmul.mubr.f32.gmra.mxu0 %v755
          %v857 = vpop.f32.mrf.mxu0
          %v858 = vadd.f32 %v736, %v857
          %v859 = vpop.f32.mrf.mxu0
          %860 = vmatprep.mubr.f32.mxu0 0.0
          %861 = vmatmul.mubr.f32.gmra.mxu0 %v758
          %v862 = vpop.f32.mrf.mxu0
          %v863 = vadd.f32 %v736, %v862
          %v864 = vpop.f32.mrf.mxu0
          %865 = vmatprep.mubr.f32.mxu0 0.0
          %866 = vmatmul.mubr.f32.gmra.mxu0 %v761
          %v867 = vpop.f32.mrf.mxu0
          %v868 = vadd.f32 %v736, %v867
          %v869 = vpop.f32.mrf.mxu0
          %870 = vmatprep.mubr.f32.mxu0 0.0
          %871 = vmatmul.mubr.f32.gmra.mxu0 %v764
          %v872 = vpop.f32.mrf.mxu0
          %v873 = vadd.f32 %v736, %v872
          %v874 = vpop.f32.mrf.mxu0
          %875 = vdwg.mxu0
          %876 = vst [vmem:[%s389] sm:$0xff] %v833
          %877 = vst [vmem:[%s389 + $0x8] sm:$0xff] %v838
          %878 = vst [vmem:[%s389 + $0x10] sm:$0xff] %v843
          %879 = vst [vmem:[%s389 + $0x18] sm:$0xff] %v848
          %880 = vst [vmem:[%s389 + $0x20] sm:$0xff] %v853
          %881 = vst [vmem:[%s389 + $0x28] sm:$0xff] %v858
          %882 = vst [vmem:[%s389 + $0x30] sm:$0xff] %v863
          %883 = vst [vmem:[%s389 + $0x38] sm:$0xff] %v868
          %884 = vst [vmem:[%s389 + $0x40] sm:$0xff] %v873
        $region60: #{tpu_custom_call.1} parent=51 // pred_fallthru
          _
        %p885 = scmp.eq.s32.totalorder %s425, 2
        // Predicated region
        $region61: #{tpu_custom_call.1} parent=51 // pred_check
          %p886 = pneg %p885
        $region62: #{tpu_custom_call.1} parent=51 // pred_check_branch
          %888 = sbr.rel (%p886) target = $region64
        $region63: #{tpu_custom_call.1} parent=51 // pred_region
          %v889 = vld [vmem:[%s420] sm:$0xff]
          %v890 = vld [vmem:[%s420 + $0x8] sm:$0xff]
          %v891 = vld [vmem:[%s420 + $0x10] sm:$0xff]
          %v892 = vld [vmem:[%s420 + $0x18] sm:$0xff]
          %v893 = vld [vmem:[%s420 + $0x20] sm:$0xff]
          %v894 = vld [vmem:[%s420 + $0x28] sm:$0xff]
          %v895 = vld [vmem:[%s420 + $0x30] sm:$0xff]
          %v896 = vld [vmem:[%s420 + $0x38] sm:$0xff]
          %v897 = vld [vmem:[%s420 + $0x40] sm:$0xff]
          %v898 = vld [vmem:[%s8] sm:$0xff]
          %v899 = vld [vmem:[%s8 + $0x8] sm:$0xff]
          %v900 = vld [vmem:[%s8 + $0x10] sm:$0xff]
          %v901 = vld [vmem:[%s8 + $0x18] sm:$0xff]
          %v902 = vld [vmem:[%s10] sm:$0x1]
          %v904 = vlaneseq
          %v905 = vshrl.u32 %v904, 7
          %v906 = vsub.s32 0, %v905
          %v907 = vrot.slane %v902, %v906
          %vm909 = vcmask 261120
          %v911 = vsel %vm909, %v889, 0
          %v914 = vsel %vm909, %v890, 0
          %v917 = vsel %vm909, %v891, 0
          %v920 = vsel %vm909, %v892, 0
          %v923 = vsel %vm909, %v893, 0
          %v926 = vsel %vm909, %v894, 0
          %v929 = vsel %vm909, %v895, 0
          %v932 = vsel %vm909, %v896, 0
          %v935 = vsel %vm909, %v897, 0
          %937 = vmatprep.subr.mxu0 0.0
          %938 = vmatpush1.msra.mxu0 0.0
          %939 = vmatprep.subr.mxu0 0.0
          %940 = vmatpush1.msra.mxu0 0.0
          %941 = vmatprep.subr.mxu0 0.0
          %942 = vmatpush1.msra.mxu0 0.0
          %943 = vmatprep.subr.mxu0 0.0
          %944 = vmatpush1.msra.mxu0 0.0
          %945 = vmatprep.subr.mxu0 0.0
          %946 = vmatpush1.msra.mxu0 0.0
          %947 = vmatprep.subr.mxu0 0.0
          %948 = vmatpush1.msra.mxu0 0.0
          %949 = vmatprep.subr.mxu0 0.0
          %950 = vmatpush1.msra.mxu0 0.0
          %951 = vmatprep.subr.mxu0 0.0
          %952 = vmatpush1.msra.mxu0 0.0
          %953 = vmatprep.subr.mxu0 0.0
          %954 = vmatpush1.msra.mxu0 0.0
          %955 = vmatprep.subr.mxu0 0.0
          %956 = vmatpush1.msra.mxu0 0.0
          %957 = vmatprep.subr.mxu0 0.0
          %958 = vmatpush1.msra.mxu0 0.0
          %959 = vmatprep.subr.mxu0 0.0
          %960 = vmatpush1.msra.mxu0 0.0
          %961 = vmatprep.subr.mxu0 0.0
          %962 = vmatpush1.msra.mxu0 %v901
          %963 = vmatprep.subr.mxu0 0.0
          %964 = vmatpush1.msra.mxu0 %v900
          %965 = vmatprep.subr.mxu0 0.0
          %966 = vmatpush1.msra.mxu0 %v899
          %967 = vmatprep.subr.mxu0 0.0
          %968 = vmatpush1.msra.mxu0 %v898
          %969 = vmatprep.subr.mxu0 0.0
          %970 = vmatpush2.msra.mxu0 0.0
          %971 = vmatprep.subr.mxu0 0.0
          %972 = vmatpush2.msra.mxu0 0.0
          %973 = vmatprep.subr.mxu0 0.0
          %974 = vmatpush2.msra.mxu0 0.0
          %975 = vmatprep.subr.mxu0 0.0
          %976 = vmatpush2.msra.mxu0 0.0
          %977 = vmatprep.subr.mxu0 0.0
          %978 = vmatpush2.msra.mxu0 0.0
          %979 = vmatprep.subr.mxu0 0.0
          %980 = vmatpush2.msra.mxu0 0.0
          %981 = vmatprep.subr.mxu0 0.0
          %982 = vmatpush2.msra.mxu0 0.0
          %983 = vmatprep.subr.mxu0 0.0
          %984 = vmatpush2.msra.mxu0 0.0
          %985 = vmatprep.subr.mxu0 0.0
          %986 = vmatpush2.msra.mxu0 0.0
          %987 = vmatprep.subr.mxu0 0.0
          %988 = vmatpush2.msra.mxu0 0.0
          %989 = vmatprep.subr.mxu0 0.0
          %990 = vmatpush2.msra.mxu0 0.0
          %991 = vmatprep.subr.mxu0 0.0
          %992 = vmatpush2.msra.mxu0 0.0
          %993 = vmatprep.subr.mxu0 0.0
          %994 = vmatpush2.msra.mxu0 0.0
          %995 = vmatprep.subr.mxu0 0.0
          %996 = vmatpush2.msra.mxu0 0.0
          %997 = vmatprep.subr.mxu0 0.0
          %998 = vmatpush2.msra.mxu0 0.0
          %999 = vmatprep.subr.mxu0 0.0
          %1000 = vmatpush2.msra.mxu0 0.0
          %1001 = vmatprep.mubr.f32.mxu0 0.0
          %1002 = vmatmul.mubr.f32.gmra.mxu0 %v911
          %v1003 = vpop.f32.mrf.mxu0
          %v1004 = vadd.f32 %v907, %v1003
          %v1005 = vpop.f32.mrf.mxu0
          %1006 = vmatprep.mubr.f32.mxu0 0.0
          %1007 = vmatmul.mubr.f32.gmra.mxu0 %v914
          %v1008 = vpop.f32.mrf.mxu0
          %v1009 = vadd.f32 %v907, %v1008
          %v1010 = vpop.f32.mrf.mxu0
          %1011 = vmatprep.mubr.f32.mxu0 0.0
          %1012 = vmatmul.mubr.f32.gmra.mxu0 %v917
          %v1013 = vpop.f32.mrf.mxu0
          %v1014 = vadd.f32 %v907, %v1013
          %v1015 = vpop.f32.mrf.mxu0
          %1016 = vmatprep.mubr.f32.mxu0 0.0
          %1017 = vmatmul.mubr.f32.gmra.mxu0 %v920
          %v1018 = vpop.f32.mrf.mxu0
          %v1019 = vadd.f32 %v907, %v1018
          %v1020 = vpop.f32.mrf.mxu0
          %1021 = vmatprep.mubr.f32.mxu0 0.0
          %1022 = vmatmul.mubr.f32.gmra.mxu0 %v923
          %v1023 = vpop.f32.mrf.mxu0
          %v1024 = vadd.f32 %v907, %v1023
          %v1025 = vpop.f32.mrf.mxu0
          %1026 = vmatprep.mubr.f32.mxu0 0.0
          %1027 = vmatmul.mubr.f32.gmra.mxu0 %v926
          %v1028 = vpop.f32.mrf.mxu0
          %v1029 = vadd.f32 %v907, %v1028
          %v1030 = vpop.f32.mrf.mxu0
          %1031 = vmatprep.mubr.f32.mxu0 0.0
          %1032 = vmatmul.mubr.f32.gmra.mxu0 %v929
          %v1033 = vpop.f32.mrf.mxu0
          %v1034 = vadd.f32 %v907, %v1033
          %v1035 = vpop.f32.mrf.mxu0
          %1036 = vmatprep.mubr.f32.mxu0 0.0
          %1037 = vmatmul.mubr.f32.gmra.mxu0 %v932
          %v1038 = vpop.f32.mrf.mxu0
          %v1039 = vadd.f32 %v907, %v1038
          %v1040 = vpop.f32.mrf.mxu0
          %1041 = vmatprep.mubr.f32.mxu0 0.0
          %1042 = vmatmul.mubr.f32.gmra.mxu0 %v935
          %v1043 = vpop.f32.mrf.mxu0
          %v1044 = vadd.f32 %v907, %v1043
          %v1045 = vpop.f32.mrf.mxu0
          %1046 = vdwg.mxu0
          %1047 = vst [vmem:[%s389] sm:$0xff] %v1004
          %1048 = vst [vmem:[%s389 + $0x8] sm:$0xff] %v1009
          %1049 = vst [vmem:[%s389 + $0x10] sm:$0xff] %v1014
          %1050 = vst [vmem:[%s389 + $0x18] sm:$0xff] %v1019
          %1051 = vst [vmem:[%s389 + $0x20] sm:$0xff] %v1024
          %1052 = vst [vmem:[%s389 + $0x28] sm:$0xff] %v1029
          %1053 = vst [vmem:[%s389 + $0x30] sm:$0xff] %v1034
          %1054 = vst [vmem:[%s389 + $0x38] sm:$0xff] %v1039
          %1055 = vst [vmem:[%s389 + $0x40] sm:$0xff] %v1044
        $region64: #{tpu_custom_call.1} parent=51 // pred_fallthru
          _
        %s1056 = sand.u32 %s245, 1
        %s1057 = scalar_lea.sflag [#allocation7], %s1056
        %s1058 = sand.u32 %s245, 1
        %s1059 = smul.addr %s1058, 72
        %s1060 = scalar_lea.vmem [#allocation6], %s1059
        // Predicated region
        $region65: #{tpu_custom_call.1} parent=51 // pred_check
          %p1061 = pneg %p255
        $region66: #{tpu_custom_call.1} parent=51 // pred_check_branch
          %1063 = sbr.rel (%p1061) target = $region68
        $region67: #{tpu_custom_call.1} parent=51 // pred_region
          %s1064 = smul.u32 9, %s39
          %s1066 = ssub.s32 1152, 1152
          %1067 = vsyncadd %s1057, %s1066
          %s1068 = smul.addr %s1064, 128
          %s1069 = scalar_lea.hbm %s11, %s1068
          %s1070 = sshll.u32 %s1060, 4
          %s1071 = int_to_ptr.vmem [resolvable:$true] %s1070
          %1076 = dma.vmem_to_hbm [thread:$0]  %s1071, 1152, %s1069, %s1057, 128, 128, 8
        $region68: #{tpu_custom_call.1} parent=51 // pred_fallthru
          _
      $region52: #{tpu_custom_call.1} parent=5 // pred_fallthru
        _
      %p1077 = scmp.le.s32.totalorder 2, %s34
      // Predicated region
      $region69: #{tpu_custom_call.1} parent=5 // pred_check
        %p1078 = pneg %p1077
      $region70: #{tpu_custom_call.1} parent=5 // pred_check_branch
        %1080 = sbr.rel (%p1078) target = $region72
      $region71: #{tpu_custom_call.1} parent=5 // pred_region
        %s1081 = ssub.s32 %s34, 2
        // Predicated region
        $region73: #{tpu_custom_call.1} parent=71 // pred_check
          %p1082 = pneg %p261
        $region74: #{tpu_custom_call.1} parent=71 // pred_check_branch
          %1084 = sbr.rel (%p1082) target = $region76
        $region75: #{tpu_custom_call.1} parent=71 // pred_region
          %s1085 = sand.u32 %s246, 1
          %s1086 = scalar_lea.sflag [#allocation7], %s1085
          %s1087 = sand.u32 %s246, 1
          %s1088 = smul.addr %s1087, 72
          %s1089 = scalar_lea.vmem [#allocation6], %s1088
          %1090 = dma.done %s1086, 1152
        $region76: #{tpu_custom_call.1} parent=71 // pred_fallthru
          _
      $region72: #{tpu_custom_call.1} parent=5 // pred_fallthru
        _
    $region6: #{tpu_custom_call.1} parent=1 // loop_footer
      %s38 = sadd.s32 1, %s34
    $region7: #{tpu_custom_call.1} parent=1 // loop_footer_branch
      %33 = sbr.rel target = $region3
    $region8: #{tpu_custom_call.1} parent=1 // loop_exit
      _
    %1091 = vsyncpa [#allocation7], 1
    %s1092 = scalar_lea.sflag [#allocation7], 1
    %1093 = vsyncpa %s1092, 1

</llo_original>
